<compile_context>
chip_gen: v5e
topology: v5e:2x2
jax: 0.10.0
libtpu: 0.0.40
codegen_flags: <defaults>
</compile_context>

<pallas_src>
import jax
import jax.numpy as jnp
from jax.experimental import pallas as pl
from jax.experimental.pallas import tpu as pltpu

# ---------------- model hyperparameters (small, consistent with the module) ----------
VOCAB_SIZE = 64
EMBED_SIZE = 32                  # D = 2 * EMBED_SIZE = 64
KERNEL_SIZES = (3, 4, 5)
NUM_CHANNELS = (8, 8, 8)         # sum = 24
NUM_CLASSES = 2
BATCH = 2
SEQ_LEN = 16

D = 2 * EMBED_SIZE               # 64   (conv input channels)
TD = SEQ_LEN * D                 # 1024 (flattened contraction depth, multiple of 128)
TD_AUG = TD + 128                # 1152 (extra 128-lane group holds the constant-1 col)
C_SUM = sum(NUM_CHANNELS)        # 24
C_PAD = 128                      # lane-dense padded channel / logit width
W_ROWS = TD_AUG + C_PAD          # 1280 packed weight-slab rows
COMPUTE_DTYPE = jnp.bfloat16


def _round_up(n, m):
    return ((n + m - 1) // m) * m


# ------------------------------- Pallas kernel ---------------------------------------
def textcnn_kernel(x_ref, w_ref, out_ref):
    """Fused TextCNN forward: (3x Conv1d + AvgPool) -> ReLU -> Linear, biases folded.

    x_ref   : (TB, TD_AUG) bf16   flattened embeddings; column TD is the constant 1
    w_ref   : (W_ROWS, 128) bf16  rows [0, TD)        folded conv+pool weights
                                  row  TD             conv bias (+1.0 in lane 127)
                                  rows (TD, TD_AUG)   zero padding (lane alignment)
                                  rows [TD_AUG, +128) decoder weight (+bias in row 127)
    out_ref : (TB, 128) f32       cols 0:2 hold the logits, remaining lanes junk/zero
    """
    x = x_ref[...]                                   # (TB, 1152) bf16
    w1 = w_ref[0:TD_AUG, :]                          # (1152, 128) bf16, tile-aligned
    w2 = w_ref[TD_AUG:W_ROWS, :]                     # (128, 128)  bf16

    # Conv + mean-pool + conv bias, folded into one matmul; f32 accumulation.
    enc = jnp.dot(x, w1, preferred_element_type=jnp.float32)
    # ReLU; padded lanes stay 0, lane 127 becomes exactly 1.0 (decoder-bias channel).
    enc = jnp.maximum(enc, 0.0).astype(w2.dtype)

    # TODO(synk): nn.Dropout(0.5) is identity in eval mode; training-mode masking is
    # intentionally not applied here.
    out_ref[...] = jnp.dot(enc, w2, preferred_element_type=jnp.float32)


# ------------------------------ parameter handling -----------------------------------
def init_params(key):
    """PyTorch-layout parameters (as the nn.Module would hold them), in f32."""
    keys = jax.random.split(key, 8)
    emb_w = jax.random.normal(keys[0], (VOCAB_SIZE, EMBED_SIZE), jnp.float32)
    const_emb_w = jax.random.normal(keys[1], (VOCAB_SIZE, EMBED_SIZE), jnp.float32)
    conv_ws, conv_bs = [], []
    for i, (c, k) in enumerate(zip(NUM_CHANNELS, KERNEL_SIZES)):
        # PyTorch Conv1d weight shape: (out_channels, in_channels, kernel_size)
        conv_ws.append(0.1 * jax.random.normal(keys[2 + i], (c, D, k), jnp.float32))
        conv_bs.append(0.01 * jnp.arange(c, dtype=jnp.float32))
    dec_w = 0.1 * jax.random.normal(keys[5], (NUM_CLASSES, C_SUM), jnp.float32)
    dec_b = 0.01 * jnp.arange(NUM_CLASSES, dtype=jnp.float32)
    return emb_w, const_emb_w, conv_ws, conv_bs, dec_w, dec_b


def prepare_kernel_params(params):
    """One-time re-layout into kernel slabs (hoisted out of the per-call path)."""
    emb_w, const_emb_w, conv_ws, conv_bs, dec_w, dec_b = params

    # cat(embedding(x), constant_embedding(x)) == one gather from the concat table.
    table = jnp.concatenate([emb_w, const_emb_w], axis=1).astype(COMPUTE_DTYPE)  # (V, D)

    # Fold Conv1d + AdaptiveAvgPool1d(1) into a single (T*D, C_PAD) matrix:
    #   M_i[t*D+d, c] = (1/L_i) * sum_{j : 0<=j<k_i, 0<=t-j<L_i} W_i[c, d, j]
    w_eff = jnp.zeros((SEQ_LEN, D, C_PAD), jnp.float32)
    b_eff = jnp.zeros((C_PAD,), jnp.float32)
    col = 0
    for w, b in zip(conv_ws, conv_bs):                           # w: (C, D, k)
        C, _, k = w.shape
        L = SEQ_LEN - k + 1
        for j in range(k):
            # output positions l = 0..L-1 read input position t = l + j
            w_eff = w_eff.at[j:j + L, :, col:col + C].add(w[:, :, j].T / L)
        b_eff = b_eff.at[col:col + C].set(b)
        col += C
    w_eff = w_eff.reshape(TD, C_PAD)

    # Constant-1 channel in lane 127 of the encoding (carries the decoder bias).
    b_eff = b_eff.at[C_PAD - 1].set(1.0)

    # First matmul weights with conv bias folded in (multiplied by x's ones column).
    w1 = jnp.zeros((TD_AUG, C_PAD), jnp.float32)
    w1 = w1.at[:TD, :].set(w_eff)
    w1 = w1.at[TD, :].set(b_eff)

    # Decoder weights, lane-dense padded, decoder bias folded into row 127.
    w2 = jnp.zeros((C_PAD, C_PAD), jnp.float32)
    w2 = w2.at[:C_SUM, :NUM_CLASSES].set(dec_w.T)
    w2 = w2.at[C_PAD - 1, :NUM_CLASSES].set(dec_b)

    # One packed bf16 slab -> a single weight DMA, VMEM-resident across grid steps.
    w_packed = jnp.concatenate([w1, w2], axis=0).astype(COMPUTE_DTYPE)  # (1280, 128)
    return table, w_packed


# ---------------------------------- forward pass --------------------------------------
@jax.jit
def textcnn_forward(tokens, table, w_packed):
    B = tokens.shape[0]

    # TODO(synk): the embedding gather stays in XLA (jnp.take); an in-kernel SMEM
    # token-prefetch gather is possible but not worth the lowering risk at this size.
    emb = jnp.take(table, tokens, axis=0)                        # (B, T, D) bf16
    x = emb.reshape(B, TD)                                       # (B, 1024) bf16

    # Append the constant-1 column (+ zero lanes up to a full 128-lane group).
    ones_col = jnp.ones((B, 1), COMPUTE_DTYPE)
    lane_pad = jnp.zeros((B, C_PAD - 1), COMPUTE_DTYPE)
    x_aug = jnp.concatenate([x, ones_col, lane_pad], axis=1)     # (B, 1152)

    # Batch tiling: TB multiple of 8 (unmasked sublane stores), pad last tile.
    TB = min(128, _round_up(B, 8))
    B_pad = _round_up(B, TB)
    if B_pad != B:
        x_aug = jnp.pad(x_aug, ((0, B_pad - B), (0, 0)))
    grid = (B_pad // TB,)

    out = pl.pallas_call(
        textcnn_kernel,
        out_shape=jax.ShapeDtypeStruct((B_pad, C_PAD), jnp.float32),
        grid_spec=pltpu.PrefetchScalarGridSpec(
            num_scalar_prefetch=0,
            grid=grid,
            in_specs=[
                pl.BlockSpec((TB, TD_AUG), lambda i: (i, 0)),        # x tile per step
                pl.BlockSpec((W_ROWS, C_PAD), lambda i: (0, 0)),     # weights: DMA once
            ],
            out_specs=pl.BlockSpec((TB, C_PAD), lambda i: (i, 0)),
        ),
        compiler_params=pltpu.CompilerParams(
            dimension_semantics=("parallel",)),                      # v7x: 2 TCs
    )(x_aug, w_packed)
    return out[:B, :NUM_CLASSES]                                     # (B, 2)


# --------------------------------- pure-JAX reference ---------------------------------
def reference_forward(tokens, params):
    """Mirrors the PyTorch forward (eval mode) directly, in f32, without any folding."""
    emb_w, const_emb_w, conv_ws, conv_bs, dec_w, dec_b = params
    e1 = jnp.take(emb_w, tokens, axis=0)
    e2 = jnp.take(const_emb_w, tokens, axis=0)
    emb = jnp.concatenate([e1, e2], axis=-1).astype(jnp.float32)  # (B, T, D)
    B, T, _ = emb.shape
    feats = []
    for w, b in zip(conv_ws, conv_bs):              # w: (C, D, k)
        k = w.shape[2]
        L = T - k + 1
        acc = jnp.zeros((B, L, w.shape[0]), jnp.float32)
        for j in range(k):
            acc = acc + jnp.einsum('bld,cd->blc', emb[:, j:j + L, :], w[:, :, j])
        acc = acc + b[None, None, :]
        pooled = jnp.mean(acc, axis=1)              # AdaptiveAvgPool1d(1) + squeeze
        feats.append(jnp.maximum(pooled, 0.0))      # ReLU (after pool, as in the module)
    enc = jnp.concatenate(feats, axis=1)            # (B, sum_C)
    return enc @ dec_w.T + dec_b[None, :]           # dropout is identity in eval


# --------------------------------------- main -----------------------------------------
if __name__ == "__main__":
    key = jax.random.PRNGKey(0)
    k_tok, k_par = jax.random.split(key)
    tokens = jax.random.randint(k_tok, (BATCH, SEQ_LEN), 0, VOCAB_SIZE, dtype=jnp.int32)
    params = init_params(k_par)

    # one-time re-layout (hoisted out of the forward path)
    table, w_packed = prepare_kernel_params(params)

    out = textcnn_forward(tokens, table, w_packed)
    out = jax.block_until_ready(out)

    ref = reference_forward(tokens, params)
    assert out.shape == (BATCH, NUM_CLASSES), out.shape
    # bf16 weights/activations (f32 accumulation) -> slightly looser tolerance vs f32 ref.
    assert jnp.allclose(out, ref, atol=2e-2, rtol=2e-2), (out, ref)

    print("KERNEL_OK")
</pallas_src>

<mosaic_0001>
module attributes {stable_mosaic.version = 11 : i64} {
  func.func @textcnn_kernel(%arg0: i32, %arg1: memref<8x1152xbf16, #tpu.memory_space<vmem>>, %arg2: memref<1280x128xbf16, #tpu.memory_space<vmem>>, %arg3: memref<8x128xf32, #tpu.memory_space<vmem>>) attributes {dimension_semantics = [#tpu.dimension_semantics<parallel>], iteration_bounds = array<i64: 1>, scalar_prefetch = 0 : i64, scratch_operands = 0 : i64, tpu.core_type = #tpu.core_type<tc>, window_params = [{transform_indices = @transform_0, window_bounds = array<i64: 8, 1152>}, {pipeline_mode = #tpu.pipeline_mode<synchronous>, transform_indices = @transform_1, window_bounds = array<i64: 1280, 128>}, {transform_indices = @transform_2, window_bounds = array<i64: 8, 128>}]} {
    %c0 = arith.constant 0 : index
    %c0_0 = arith.constant 0 : index
    %0 = vector.load %arg1[%c0, %c0_0] : memref<8x1152xbf16, #tpu.memory_space<vmem>>, vector<8x1152xbf16>
    %c0_1 = arith.constant 0 : index
    %c0_2 = arith.constant 0 : index
    %1 = vector.load %arg2[%c0_1, %c0_2] : memref<1280x128xbf16, #tpu.memory_space<vmem>>, vector<1152x128xbf16>
    %c1152 = arith.constant 1152 : index
    %c0_3 = arith.constant 0 : index
    %2 = vector.load %arg2[%c1152, %c0_3] : memref<1280x128xbf16, #tpu.memory_space<vmem>>, vector<128x128xbf16>
    %cst = arith.constant dense<0.000000e+00> : vector<8x128xf32>
    %3 = tpu.matmul %0, %1, %cst {dimension_numbers = #tpu.dot_dimension_numbers<[1], [0], [0], [1], [0, 0, 1, 1], [], []>} : vector<8x1152xbf16>, vector<1152x128xbf16>, vector<8x128xf32> -> vector<8x128xf32>
    %cst_4 = arith.constant 0.000000e+00 : f32
    %4 = vector.broadcast %cst_4 : f32 to vector<8x128xf32>
    %5 = arith.maximumf %3, %4 : vector<8x128xf32>
    %6 = arith.truncf %5 : vector<8x128xf32> to vector<8x128xbf16>
    %cst_5 = arith.constant dense<0.000000e+00> : vector<8x128xf32>
    %7 = tpu.matmul %6, %2, %cst_5 {dimension_numbers = #tpu.dot_dimension_numbers<[1], [0], [0], [1], [0, 0, 1, 1], [], []>} : vector<8x128xbf16>, vector<128x128xbf16>, vector<8x128xf32> -> vector<8x128xf32>
    %c0_6 = arith.constant 0 : index
    %c0_7 = arith.constant 0 : index
    %8 = vector.load %arg3[%c0_6, %c0_7] : memref<8x128xf32, #tpu.memory_space<vmem>>, vector<8x128xf32>
    tpu.vector_store %arg3[%c0_6, %c0_7], %7 {strides = array<i32>} : memref<8x128xf32, #tpu.memory_space<vmem>>, vector<8x128xf32>,
    return
  }
  func.func @transform_0(%arg0: i32) -> (i32, i32) {
    %c0_i32 = arith.constant 0 : i32
    %c0_i32_0 = arith.constant 0 : i32
    return %arg0, %c0_i32 : i32, i32
  }
  func.func @transform_1(%arg0: i32) -> (i32, i32) {
    %c0_i32 = arith.constant 0 : i32
    %c0_i32_0 = arith.constant 0 : i32
    %c0_i32_1 = arith.constant 0 : i32
    return %c0_i32, %c0_i32_0 : i32, i32
  }
  func.func @transform_2(%arg0: i32) -> (i32, i32) {
    %c0_i32 = arith.constant 0 : i32
    %c0_i32_0 = arith.constant 0 : i32
    return %arg0, %c0_i32 : i32, i32
  }
}

</mosaic_0001>

<llo_original>
// kernel: textcnn_forward.1
$region0: #{textcnn_forward.1}
  #allocation0 [shape = 'u32[]', space=smem, size = 0x4, offset = 0x4, fixed_abs, tag = 'smem constant byte address 0x4 - core index']
  #allocation1 [shape = 'u32[72,128]{1,0:T(1,128)}', space=vmem, size = 0x9000, scoped, tag = 'internal scratch']
  %s0 = inlined_call_operand.vmem [shape: bf16[8,1152], index: 0, kind: input, shape index: {}]
  %s1 = inlined_call_operand.hbm [shape: bf16[1280,128], index: 1, kind: input, shape index: {}]
  %s2 = inlined_call_operand.vmem [shape: f32[8,128], index: 2, kind: output, shape index: {}]
  %s3 = sld [smem:[#allocation0]]
  $region22: #{textcnn_forward.1} parent=0
    _
  %s5 = ssub.s32 1, %s3
  %s6 = scalar_select 0, %s5, %s3
  $region1: #{textcnn_forward.1} parent=0
    #allocation2 [shape = 'u8[327680]{0}', space=vmem, size = 0x50000, scoped, tag = 'input window, operand 1, single buffered']
    #allocation3 [shape = 's32[1]{0}', space=sflag, size = 0x4, scoped, tag = 'scoped memory for textcnn_forward.1']
    %7 = vsyncpa [#allocation3], 0
    // Predicated region
    $region2: #{textcnn_forward.1} parent=1 // pred_check
      _
    $region3: #{textcnn_forward.1} parent=1 // pred_check_branch
      %9 = sbr.rel (0) target = $region5
    $region4: #{textcnn_forward.1} parent=1 // pred_region
      _
    $region5: #{textcnn_forward.1} parent=1 // pred_fallthru
      _
    // Predicated region
    $region6: #{textcnn_forward.1} parent=1 // pred_check
      _
    $region7: #{textcnn_forward.1} parent=1 // pred_check_branch
      %11 = sbr.rel (0) target = $region9
    $region8: #{textcnn_forward.1} parent=1 // pred_region
      %13 = vsyncadd [#allocation3], 0
      %s14 = sshll.u32 %s1, 4
      %s15 = int_to_ptr.hbm [resolvable:$true] %s14
      %s16 = sshll.u32 [#allocation2], 4
      %s17 = int_to_ptr.vmem [resolvable:$true] %s16
      %22 = dma.hbm_to_vmem [thread:$0]  %s15, 10240, %s17, [#allocation3], 64, 64, 4
    $region9: #{textcnn_forward.1} parent=1 // pred_fallthru
      _
    // Predicated region
    $region10: #{textcnn_forward.1} parent=1 // pred_check
      _
    $region11: #{textcnn_forward.1} parent=1 // pred_check_branch
      %24 = sbr.rel (0) target = $region13
    $region12: #{textcnn_forward.1} parent=1 // pred_region
      %26 = dma.done [#allocation3], 10240
    $region13: #{textcnn_forward.1} parent=1 // pred_fallthru
      _
    %v27 = vld [vmem:[%s0] sm:$0xff]
    %v28 = vld [vmem:[%s0 + $0x8] sm:$0xff]
    %v29 = vld [vmem:[%s0 + $0x10] sm:$0xff]
    %v30 = vld [vmem:[%s0 + $0x18] sm:$0xff]
    %v31 = vld [vmem:[%s0 + $0x20] sm:$0xf]
    %v32 = vld [vmem:[#allocation2] sm:$0xf]
    %v33 = vld [vmem:[#allocation2 + $0x4] sm:$0xf]
    %v34 = vld [vmem:[#allocation2 + $0x8] sm:$0xf]
    %v35 = vld [vmem:[#allocation2 + $0xc] sm:$0xf]
    %v36 = vld [vmem:[#allocation2 + $0x10] sm:$0xf]
    %v37 = vld [vmem:[#allocation2 + $0x14] sm:$0xf]
    %v38 = vld [vmem:[#allocation2 + $0x18] sm:$0xf]
    %v39 = vld [vmem:[#allocation2 + $0x1c] sm:$0xf]
    %v40 = vld [vmem:[#allocation2 + $0x20] sm:$0xf]
    %v41 = vld [vmem:[#allocation2 + $0x24] sm:$0xf]
    %v42 = vld [vmem:[#allocation2 + $0x28] sm:$0xf]
    %v43 = vld [vmem:[#allocation2 + $0x2c] sm:$0xf]
    %v44 = vld [vmem:[#allocation2 + $0x30] sm:$0xf]
    %v45 = vld [vmem:[#allocation2 + $0x34] sm:$0xf]
    %v46 = vld [vmem:[#allocation2 + $0x38] sm:$0xf]
    %v47 = vld [vmem:[#allocation2 + $0x3c] sm:$0xf]
    %v48 = vld [vmem:[#allocation2 + $0x40] sm:$0xf]
    %v49 = vld [vmem:[#allocation2 + $0x44] sm:$0xf]
    %v50 = vld [vmem:[#allocation2 + $0x48] sm:$0xf]
    %v51 = vld [vmem:[#allocation2 + $0x4c] sm:$0xf]
    %v52 = vld [vmem:[#allocation2 + $0x50] sm:$0xf]
    %v53 = vld [vmem:[#allocation2 + $0x54] sm:$0xf]
    %v54 = vld [vmem:[#allocation2 + $0x58] sm:$0xf]
    %v55 = vld [vmem:[#allocation2 + $0x5c] sm:$0xf]
    %v56 = vld [vmem:[#allocation2 + $0x60] sm:$0xf]
    %v57 = vld [vmem:[#allocation2 + $0x64] sm:$0xf]
    %v58 = vld [vmem:[#allocation2 + $0x68] sm:$0xf]
    %v59 = vld [vmem:[#allocation2 + $0x6c] sm:$0xf]
    %v60 = vld [vmem:[#allocation2 + $0x70] sm:$0xf]
    %v61 = vld [vmem:[#allocation2 + $0x74] sm:$0xf]
    %v62 = vld [vmem:[#allocation2 + $0x78] sm:$0xf]
    %v63 = vld [vmem:[#allocation2 + $0x7c] sm:$0xf]
    %v64 = vld [vmem:[#allocation2 + $0x80] sm:$0xf]
    %v65 = vld [vmem:[#allocation2 + $0x84] sm:$0xf]
    %v66 = vld [vmem:[#allocation2 + $0x88] sm:$0xf]
    %v67 = vld [vmem:[#allocation2 + $0x8c] sm:$0xf]
    %v68 = vld [vmem:[#allocation2 + $0x90] sm:$0xf]
    %v69 = vld [vmem:[#allocation2 + $0x94] sm:$0xf]
    %v70 = vld [vmem:[#allocation2 + $0x98] sm:$0xf]
    %v71 = vld [vmem:[#allocation2 + $0x9c] sm:$0xf]
    %v72 = vld [vmem:[#allocation2 + $0xa0] sm:$0xf]
    %v73 = vld [vmem:[#allocation2 + $0xa4] sm:$0xf]
    %v74 = vld [vmem:[#allocation2 + $0xa8] sm:$0xf]
    %v75 = vld [vmem:[#allocation2 + $0xac] sm:$0xf]
    %v76 = vld [vmem:[#allocation2 + $0xb0] sm:$0xf]
    %v77 = vld [vmem:[#allocation2 + $0xb4] sm:$0xf]
    %v78 = vld [vmem:[#allocation2 + $0xb8] sm:$0xf]
    %v79 = vld [vmem:[#allocation2 + $0xbc] sm:$0xf]
    %v80 = vld [vmem:[#allocation2 + $0xc0] sm:$0xf]
    %v81 = vld [vmem:[#allocation2 + $0xc4] sm:$0xf]
    %v82 = vld [vmem:[#allocation2 + $0xc8] sm:$0xf]
    %v83 = vld [vmem:[#allocation2 + $0xcc] sm:$0xf]
    %v84 = vld [vmem:[#allocation2 + $0xd0] sm:$0xf]
    %v85 = vld [vmem:[#allocation2 + $0xd4] sm:$0xf]
    %v86 = vld [vmem:[#allocation2 + $0xd8] sm:$0xf]
    %v87 = vld [vmem:[#allocation2 + $0xdc] sm:$0xf]
    %v88 = vld [vmem:[#allocation2 + $0xe0] sm:$0xf]
    %v89 = vld [vmem:[#allocation2 + $0xe4] sm:$0xf]
    %v90 = vld [vmem:[#allocation2 + $0xe8] sm:$0xf]
    %v91 = vld [vmem:[#allocation2 + $0xec] sm:$0xf]
    %v92 = vld [vmem:[#allocation2 + $0xf0] sm:$0xf]
    %v93 = vld [vmem:[#allocation2 + $0xf4] sm:$0xf]
    %v94 = vld [vmem:[#allocation2 + $0xf8] sm:$0xf]
    %v95 = vld [vmem:[#allocation2 + $0xfc] sm:$0xf]
    %v96 = vld [vmem:[#allocation2 + $0x100] sm:$0xf]
    %v97 = vld [vmem:[#allocation2 + $0x104] sm:$0xf]
    %v98 = vld [vmem:[#allocation2 + $0x108] sm:$0xf]
    %v99 = vld [vmem:[#allocation2 + $0x10c] sm:$0xf]
    %v100 = vld [vmem:[#allocation2 + $0x110] sm:$0xf]
    %v101 = vld [vmem:[#allocation2 + $0x114] sm:$0xf]
    %v102 = vld [vmem:[#allocation2 + $0x118] sm:$0xf]
    %v103 = vld [vmem:[#allocation2 + $0x11c] sm:$0xf]
    %v104 = vld [vmem:[#allocation2 + $0x120] sm:$0xf]
    %v105 = vld [vmem:[#allocation2 + $0x124] sm:$0xf]
    %v106 = vld [vmem:[#allocation2 + $0x128] sm:$0xf]
    %v107 = vld [vmem:[#allocation2 + $0x12c] sm:$0xf]
    %v108 = vld [vmem:[#allocation2 + $0x130] sm:$0xf]
    %v109 = vld [vmem:[#allocation2 + $0x134] sm:$0xf]
    %v110 = vld [vmem:[#allocation2 + $0x138] sm:$0xf]
    %v111 = vld [vmem:[#allocation2 + $0x13c] sm:$0xf]
    %v112 = vld [vmem:[#allocation2 + $0x140] sm:$0xf]
    %v113 = vld [vmem:[#allocation2 + $0x144] sm:$0xf]
    %v114 = vld [vmem:[#allocation2 + $0x148] sm:$0xf]
    %v115 = vld [vmem:[#allocation2 + $0x14c] sm:$0xf]
    %v116 = vld [vmem:[#allocation2 + $0x150] sm:$0xf]
    %v117 = vld [vmem:[#allocation2 + $0x154] sm:$0xf]
    %v118 = vld [vmem:[#allocation2 + $0x158] sm:$0xf]
    %v119 = vld [vmem:[#allocation2 + $0x15c] sm:$0xf]
    %v120 = vld [vmem:[#allocation2 + $0x160] sm:$0xf]
    %v121 = vld [vmem:[#allocation2 + $0x164] sm:$0xf]
    %v122 = vld [vmem:[#allocation2 + $0x168] sm:$0xf]
    %v123 = vld [vmem:[#allocation2 + $0x16c] sm:$0xf]
    %v124 = vld [vmem:[#allocation2 + $0x170] sm:$0xf]
    %v125 = vld [vmem:[#allocation2 + $0x174] sm:$0xf]
    %v126 = vld [vmem:[#allocation2 + $0x178] sm:$0xf]
    %v127 = vld [vmem:[#allocation2 + $0x17c] sm:$0xf]
    %v128 = vld [vmem:[#allocation2 + $0x180] sm:$0xf]
    %v129 = vld [vmem:[#allocation2 + $0x184] sm:$0xf]
    %v130 = vld [vmem:[#allocation2 + $0x188] sm:$0xf]
    %v131 = vld [vmem:[#allocation2 + $0x18c] sm:$0xf]
    %v132 = vld [vmem:[#allocation2 + $0x190] sm:$0xf]
    %v133 = vld [vmem:[#allocation2 + $0x194] sm:$0xf]
    %v134 = vld [vmem:[#allocation2 + $0x198] sm:$0xf]
    %v135 = vld [vmem:[#allocation2 + $0x19c] sm:$0xf]
    %v136 = vld [vmem:[#allocation2 + $0x1a0] sm:$0xf]
    %v137 = vld [vmem:[#allocation2 + $0x1a4] sm:$0xf]
    %v138 = vld [vmem:[#allocation2 + $0x1a8] sm:$0xf]
    %v139 = vld [vmem:[#allocation2 + $0x1ac] sm:$0xf]
    %v140 = vld [vmem:[#allocation2 + $0x1b0] sm:$0xf]
    %v141 = vld [vmem:[#allocation2 + $0x1b4] sm:$0xf]
    %v142 = vld [vmem:[#allocation2 + $0x1b8] sm:$0xf]
    %v143 = vld [vmem:[#allocation2 + $0x1bc] sm:$0xf]
    %v144 = vld [vmem:[#allocation2 + $0x1c0] sm:$0xf]
    %v145 = vld [vmem:[#allocation2 + $0x1c4] sm:$0xf]
    %v146 = vld [vmem:[#allocation2 + $0x1c8] sm:$0xf]
    %v147 = vld [vmem:[#allocation2 + $0x1cc] sm:$0xf]
    %v148 = vld [vmem:[#allocation2 + $0x1d0] sm:$0xf]
    %v149 = vld [vmem:[#allocation2 + $0x1d4] sm:$0xf]
    %v150 = vld [vmem:[#allocation2 + $0x1d8] sm:$0xf]
    %v151 = vld [vmem:[#allocation2 + $0x1dc] sm:$0xf]
    %v152 = vld [vmem:[#allocation2 + $0x1e0] sm:$0xf]
    %v153 = vld [vmem:[#allocation2 + $0x1e4] sm:$0xf]
    %v154 = vld [vmem:[#allocation2 + $0x1e8] sm:$0xf]
    %v155 = vld [vmem:[#allocation2 + $0x1ec] sm:$0xf]
    %v156 = vld [vmem:[#allocation2 + $0x1f0] sm:$0xf]
    %v157 = vld [vmem:[#allocation2 + $0x1f4] sm:$0xf]
    %v158 = vld [vmem:[#allocation2 + $0x1f8] sm:$0xf]
    %v159 = vld [vmem:[#allocation2 + $0x1fc] sm:$0xf]
    %v160 = vld [vmem:[#allocation2 + $0x200] sm:$0xf]
    %v161 = vld [vmem:[#allocation2 + $0x204] sm:$0xf]
    %v162 = vld [vmem:[#allocation2 + $0x208] sm:$0xf]
    %v163 = vld [vmem:[#allocation2 + $0x20c] sm:$0xf]
    %v164 = vld [vmem:[#allocation2 + $0x210] sm:$0xf]
    %v165 = vld [vmem:[#allocation2 + $0x214] sm:$0xf]
    %v166 = vld [vmem:[#allocation2 + $0x218] sm:$0xf]
    %v167 = vld [vmem:[#allocation2 + $0x21c] sm:$0xf]
    %v168 = vld [vmem:[#allocation2 + $0x220] sm:$0xf]
    %v169 = vld [vmem:[#allocation2 + $0x224] sm:$0xf]
    %v170 = vld [vmem:[#allocation2 + $0x228] sm:$0xf]
    %v171 = vld [vmem:[#allocation2 + $0x22c] sm:$0xf]
    %v172 = vld [vmem:[#allocation2 + $0x230] sm:$0xf]
    %v173 = vld [vmem:[#allocation2 + $0x234] sm:$0xf]
    %v174 = vld [vmem:[#allocation2 + $0x238] sm:$0xf]
    %v175 = vld [vmem:[#allocation2 + $0x23c] sm:$0xf]
    %v176 = vld [vmem:[#allocation2 + $0x240] sm:$0xf]
    %v177 = vld [vmem:[#allocation2 + $0x244] sm:$0xf]
    %v178 = vld [vmem:[#allocation2 + $0x248] sm:$0xf]
    %v179 = vld [vmem:[#allocation2 + $0x24c] sm:$0xf]
    %v180 = vld [vmem:[#allocation2 + $0x250] sm:$0xf]
    %v181 = vld [vmem:[#allocation2 + $0x254] sm:$0xf]
    %v182 = vld [vmem:[#allocation2 + $0x258] sm:$0xf]
    %v183 = vld [vmem:[#allocation2 + $0x25c] sm:$0xf]
    %v184 = vld [vmem:[#allocation2 + $0x260] sm:$0xf]
    %v185 = vld [vmem:[#allocation2 + $0x264] sm:$0xf]
    %v186 = vld [vmem:[#allocation2 + $0x268] sm:$0xf]
    %v187 = vld [vmem:[#allocation2 + $0x26c] sm:$0xf]
    %v188 = vld [vmem:[#allocation2 + $0x270] sm:$0xf]
    %v189 = vld [vmem:[#allocation2 + $0x274] sm:$0xf]
    %v190 = vld [vmem:[#allocation2 + $0x278] sm:$0xf]
    %v191 = vld [vmem:[#allocation2 + $0x27c] sm:$0xf]
    %v197 = vunpack.c.l.b16 %v27
    %v198 = vunpack.c.h.b16 %v27
    %v199 = vunpack.c.l.b16 %v28
    %v200 = vunpack.c.h.b16 %v28
    %v201 = vunpack.c.l.b16 %v29
    %v202 = vunpack.c.h.b16 %v29
    %v203 = vunpack.c.l.b16 %v30
    %v204 = vunpack.c.h.b16 %v30
    %v205 = vunpack.c.l.b16 %v31
    %v206 = vpack.c.b16 %v197, %v197
    %v207 = vpack.c.b16 %v198, %v198
    %v208 = vpack.c.b16 %v199, %v199
    %v209 = vpack.c.b16 %v200, %v200
    %v210 = vpack.c.b16 %v201, %v201
    %v211 = vpack.c.b16 %v202, %v202
    %v212 = vpack.c.b16 %v203, %v203
    %v213 = vpack.c.b16 %v204, %v204
    %v214 = vpack.c.b16 %v205, %v205
    %v368 = vunpack.c.l.b16 %v32
    %v369 = vunpack.c.l.b16 %v33
    %v370 = vunpack.c.l.b16 %v34
    %v371 = vunpack.c.l.b16 %v35
    %v372 = vunpack.c.l.b16 %v36
    %v373 = vunpack.c.l.b16 %v37
    %v374 = vunpack.c.l.b16 %v38
    %v375 = vunpack.c.l.b16 %v39
    %v376 = vunpack.c.l.b16 %v40
    %v377 = vunpack.c.l.b16 %v41
    %v378 = vunpack.c.l.b16 %v42
    %v379 = vunpack.c.l.b16 %v43
    %v380 = vunpack.c.l.b16 %v44
    %v381 = vunpack.c.l.b16 %v45
    %v382 = vunpack.c.l.b16 %v46
    %v383 = vunpack.c.l.b16 %v47
    %v384 = vunpack.c.l.b16 %v48
    %v385 = vunpack.c.l.b16 %v49
    %v386 = vunpack.c.l.b16 %v50
    %v387 = vunpack.c.l.b16 %v51
    %v388 = vunpack.c.l.b16 %v52
    %v389 = vunpack.c.l.b16 %v53
    %v390 = vunpack.c.l.b16 %v54
    %v391 = vunpack.c.l.b16 %v55
    %v392 = vunpack.c.l.b16 %v56
    %v393 = vunpack.c.l.b16 %v57
    %v394 = vunpack.c.l.b16 %v58
    %v395 = vunpack.c.l.b16 %v59
    %v396 = vunpack.c.l.b16 %v60
    %v397 = vunpack.c.l.b16 %v61
    %v398 = vunpack.c.l.b16 %v62
    %v399 = vunpack.c.l.b16 %v63
    %v400 = vunpack.c.l.b16 %v64
    %v401 = vunpack.c.l.b16 %v65
    %v402 = vunpack.c.l.b16 %v66
    %v403 = vunpack.c.l.b16 %v67
    %v404 = vunpack.c.l.b16 %v68
    %v405 = vunpack.c.l.b16 %v69
    %v406 = vunpack.c.l.b16 %v70
    %v407 = vunpack.c.l.b16 %v71
    %v408 = vunpack.c.l.b16 %v72
    %v409 = vunpack.c.l.b16 %v73
    %v410 = vunpack.c.l.b16 %v74
    %v411 = vunpack.c.l.b16 %v75
    %v412 = vunpack.c.l.b16 %v76
    %v413 = vunpack.c.l.b16 %v77
    %v414 = vunpack.c.l.b16 %v78
    %v415 = vunpack.c.l.b16 %v79
    %v416 = vunpack.c.l.b16 %v80
    %v417 = vunpack.c.l.b16 %v81
    %v418 = vunpack.c.l.b16 %v82
    %v419 = vunpack.c.l.b16 %v83
    %v420 = vunpack.c.l.b16 %v84
    %v421 = vunpack.c.l.b16 %v85
    %v422 = vunpack.c.l.b16 %v86
    %v423 = vunpack.c.l.b16 %v87
    %v424 = vunpack.c.l.b16 %v88
    %v425 = vunpack.c.l.b16 %v89
    %v426 = vunpack.c.l.b16 %v90
    %v427 = vunpack.c.l.b16 %v91
    %v428 = vunpack.c.l.b16 %v92
    %v429 = vunpack.c.l.b16 %v93
    %v430 = vunpack.c.l.b16 %v94
    %v431 = vunpack.c.l.b16 %v95
    %v432 = vunpack.c.l.b16 %v96
    %v433 = vunpack.c.l.b16 %v97
    %v434 = vunpack.c.l.b16 %v98
    %v435 = vunpack.c.l.b16 %v99
    %v436 = vunpack.c.l.b16 %v100
    %v437 = vunpack.c.l.b16 %v101
    %v438 = vunpack.c.l.b16 %v102
    %v439 = vunpack.c.l.b16 %v103
    %v440 = vunpack.c.l.b16 %v104
    %v441 = vunpack.c.l.b16 %v105
    %v442 = vunpack.c.l.b16 %v106
    %v443 = vunpack.c.l.b16 %v107
    %v444 = vunpack.c.l.b16 %v108
    %v445 = vunpack.c.l.b16 %v109
    %v446 = vunpack.c.l.b16 %v110
    %v447 = vunpack.c.l.b16 %v111
    %v448 = vunpack.c.l.b16 %v112
    %v449 = vunpack.c.l.b16 %v113
    %v450 = vunpack.c.l.b16 %v114
    %v451 = vunpack.c.l.b16 %v115
    %v452 = vunpack.c.l.b16 %v116
    %v453 = vunpack.c.l.b16 %v117
    %v454 = vunpack.c.l.b16 %v118
    %v455 = vunpack.c.l.b16 %v119
    %v456 = vunpack.c.l.b16 %v120
    %v457 = vunpack.c.l.b16 %v121
    %v458 = vunpack.c.l.b16 %v122
    %v459 = vunpack.c.l.b16 %v123
    %v460 = vunpack.c.l.b16 %v124
    %v461 = vunpack.c.l.b16 %v125
    %v462 = vunpack.c.l.b16 %v126
    %v463 = vunpack.c.l.b16 %v127
    %v464 = vunpack.c.l.b16 %v128
    %v465 = vunpack.c.l.b16 %v129
    %v466 = vunpack.c.l.b16 %v130
    %v467 = vunpack.c.l.b16 %v131
    %v468 = vunpack.c.l.b16 %v132
    %v469 = vunpack.c.l.b16 %v133
    %v470 = vunpack.c.l.b16 %v134
    %v471 = vunpack.c.l.b16 %v135
    %v472 = vunpack.c.l.b16 %v136
    %v473 = vunpack.c.l.b16 %v137
    %v474 = vunpack.c.l.b16 %v138
    %v475 = vunpack.c.l.b16 %v139
    %v476 = vunpack.c.l.b16 %v140
    %v477 = vunpack.c.l.b16 %v141
    %v478 = vunpack.c.l.b16 %v142
    %v479 = vunpack.c.l.b16 %v143
    %v480 = vunpack.c.l.b16 %v144
    %v481 = vunpack.c.l.b16 %v145
    %v482 = vunpack.c.l.b16 %v146
    %v483 = vunpack.c.l.b16 %v147
    %v484 = vunpack.c.l.b16 %v148
    %v485 = vunpack.c.l.b16 %v149
    %v486 = vunpack.c.l.b16 %v150
    %v487 = vunpack.c.l.b16 %v151
    %v488 = vunpack.c.l.b16 %v152
    %v489 = vunpack.c.l.b16 %v153
    %v490 = vunpack.c.l.b16 %v154
    %v491 = vunpack.c.l.b16 %v155
    %v492 = vunpack.c.l.b16 %v156
    %v493 = vunpack.c.l.b16 %v157
    %v494 = vunpack.c.l.b16 %v158
    %v495 = vunpack.c.l.b16 %v159
    %v496 = vunpack.c.l.b16 %v160
    %v497 = vunpack.c.l.b16 %v161
    %v498 = vunpack.c.l.b16 %v162
    %v499 = vunpack.c.l.b16 %v163
    %v500 = vunpack.c.l.b16 %v164
    %v501 = vunpack.c.l.b16 %v165
    %v502 = vunpack.c.l.b16 %v166
    %v503 = vunpack.c.l.b16 %v167
    %v504 = vunpack.c.l.b16 %v168
    %v505 = vunpack.c.l.b16 %v169
    %v506 = vunpack.c.l.b16 %v170
    %v507 = vunpack.c.l.b16 %v171
    %v508 = vunpack.c.l.b16 %v172
    %v509 = vunpack.c.l.b16 %v173
    %v510 = vunpack.c.l.b16 %v174
    %v511 = vunpack.c.l.b16 %v175
    %v512 = vpack.c.b16 %v369, %v368
    %v513 = vpack.c.b16 %v371, %v370
    %v514 = vpack.c.b16 %v373, %v372
    %v515 = vpack.c.b16 %v375, %v374
    %v516 = vpack.c.b16 %v377, %v376
    %v517 = vpack.c.b16 %v379, %v378
    %v518 = vpack.c.b16 %v381, %v380
    %v519 = vpack.c.b16 %v383, %v382
    %v520 = vpack.c.b16 %v385, %v384
    %v521 = vpack.c.b16 %v387, %v386
    %v522 = vpack.c.b16 %v389, %v388
    %v523 = vpack.c.b16 %v391, %v390
    %v524 = vpack.c.b16 %v393, %v392
    %v525 = vpack.c.b16 %v395, %v394
    %v526 = vpack.c.b16 %v397, %v396
    %v527 = vpack.c.b16 %v399, %v398
    %v528 = vpack.c.b16 %v401, %v400
    %v529 = vpack.c.b16 %v403, %v402
    %v530 = vpack.c.b16 %v405, %v404
    %v531 = vpack.c.b16 %v407, %v406
    %v532 = vpack.c.b16 %v409, %v408
    %v533 = vpack.c.b16 %v411, %v410
    %v534 = vpack.c.b16 %v413, %v412
    %v535 = vpack.c.b16 %v415, %v414
    %v536 = vpack.c.b16 %v417, %v416
    %v537 = vpack.c.b16 %v419, %v418
    %v538 = vpack.c.b16 %v421, %v420
    %v539 = vpack.c.b16 %v423, %v422
    %v540 = vpack.c.b16 %v425, %v424
    %v541 = vpack.c.b16 %v427, %v426
    %v542 = vpack.c.b16 %v429, %v428
    %v543 = vpack.c.b16 %v431, %v430
    %v544 = vpack.c.b16 %v433, %v432
    %v545 = vpack.c.b16 %v435, %v434
    %v546 = vpack.c.b16 %v437, %v436
    %v547 = vpack.c.b16 %v439, %v438
    %v548 = vpack.c.b16 %v441, %v440
    %v549 = vpack.c.b16 %v443, %v442
    %v550 = vpack.c.b16 %v445, %v444
    %v551 = vpack.c.b16 %v447, %v446
    %v552 = vpack.c.b16 %v449, %v448
    %v553 = vpack.c.b16 %v451, %v450
    %v554 = vpack.c.b16 %v453, %v452
    %v555 = vpack.c.b16 %v455, %v454
    %v556 = vpack.c.b16 %v457, %v456
    %v557 = vpack.c.b16 %v459, %v458
    %v558 = vpack.c.b16 %v461, %v460
    %v559 = vpack.c.b16 %v463, %v462
    %v560 = vpack.c.b16 %v465, %v464
    %v561 = vpack.c.b16 %v467, %v466
    %v562 = vpack.c.b16 %v469, %v468
    %v563 = vpack.c.b16 %v471, %v470
    %v564 = vpack.c.b16 %v473, %v472
    %v565 = vpack.c.b16 %v475, %v474
    %v566 = vpack.c.b16 %v477, %v476
    %v567 = vpack.c.b16 %v479, %v478
    %v568 = vpack.c.b16 %v481, %v480
    %v569 = vpack.c.b16 %v483, %v482
    %v570 = vpack.c.b16 %v485, %v484
    %v571 = vpack.c.b16 %v487, %v486
    %v572 = vpack.c.b16 %v489, %v488
    %v573 = vpack.c.b16 %v491, %v490
    %v574 = vpack.c.b16 %v493, %v492
    %v575 = vpack.c.b16 %v495, %v494
    %v576 = vpack.c.b16 %v497, %v496
    %v577 = vpack.c.b16 %v499, %v498
    %v578 = vpack.c.b16 %v501, %v500
    %v579 = vpack.c.b16 %v503, %v502
    %v580 = vpack.c.b16 %v505, %v504
    %v581 = vpack.c.b16 %v507, %v506
    %v582 = vpack.c.b16 %v509, %v508
    %v583 = vpack.c.b16 %v511, %v510
    %656 = vmatpush.bf16.msra.mxu0 %v519
    %657 = vmatpush.bf16.msra.mxu0 %v518
    %658 = vmatpush.bf16.msra.mxu0 %v517
    %659 = vmatpush.bf16.msra.mxu0 %v516
    %660 = vmatpush.bf16.msra.mxu0 %v515
    %661 = vmatpush.bf16.msra.mxu0 %v514
    %662 = vmatpush.bf16.msra.mxu0 %v513
    %663 = vmatpush.bf16.msra.mxu0 %v512
    %664 = vmatmul.bf16.gmra.mxu0 %v206
    %v665 = vpop.f32.mrf.mxu0
    %v666 = vadd.f32 0.0, %v665
    %v667 = vpop.f32.mrf.mxu0
    %668 = vdwg.mxu0
    %669 = vmatpush.bf16.msra.mxu0 %v527
    %670 = vmatpush.bf16.msra.mxu0 %v526
    %671 = vmatpush.bf16.msra.mxu0 %v525
    %672 = vmatpush.bf16.msra.mxu0 %v524
    %673 = vmatpush.bf16.msra.mxu0 %v523
    %674 = vmatpush.bf16.msra.mxu0 %v522
    %675 = vmatpush.bf16.msra.mxu0 %v521
    %676 = vmatpush.bf16.msra.mxu0 %v520
    %677 = vmatmul.bf16.gmra.mxu0 %v207
    %v678 = vpop.f32.mrf.mxu0
    %v679 = vadd.f32 %v666, %v678
    %v680 = vpop.f32.mrf.mxu0
    %681 = vdwg.mxu0
    %682 = vmatpush.bf16.msra.mxu0 %v535
    %683 = vmatpush.bf16.msra.mxu0 %v534
    %684 = vmatpush.bf16.msra.mxu0 %v533
    %685 = vmatpush.bf16.msra.mxu0 %v532
    %686 = vmatpush.bf16.msra.mxu0 %v531
    %687 = vmatpush.bf16.msra.mxu0 %v530
    %688 = vmatpush.bf16.msra.mxu0 %v529
    %689 = vmatpush.bf16.msra.mxu0 %v528
    %690 = vmatmul.bf16.gmra.mxu0 %v208
    %v691 = vpop.f32.mrf.mxu0
    %v692 = vadd.f32 %v679, %v691
    %v693 = vpop.f32.mrf.mxu0
    %694 = vdwg.mxu0
    %695 = vmatpush.bf16.msra.mxu0 %v543
    %696 = vmatpush.bf16.msra.mxu0 %v542
    %697 = vmatpush.bf16.msra.mxu0 %v541
    %698 = vmatpush.bf16.msra.mxu0 %v540
    %699 = vmatpush.bf16.msra.mxu0 %v539
    %700 = vmatpush.bf16.msra.mxu0 %v538
    %701 = vmatpush.bf16.msra.mxu0 %v537
    %702 = vmatpush.bf16.msra.mxu0 %v536
    %703 = vmatmul.bf16.gmra.mxu0 %v209
    %v704 = vpop.f32.mrf.mxu0
    %v705 = vadd.f32 %v692, %v704
    %v706 = vpop.f32.mrf.mxu0
    %707 = vdwg.mxu0
    %708 = vmatpush.bf16.msra.mxu0 %v551
    %709 = vmatpush.bf16.msra.mxu0 %v550
    %710 = vmatpush.bf16.msra.mxu0 %v549
    %711 = vmatpush.bf16.msra.mxu0 %v548
    %712 = vmatpush.bf16.msra.mxu0 %v547
    %713 = vmatpush.bf16.msra.mxu0 %v546
    %714 = vmatpush.bf16.msra.mxu0 %v545
    %715 = vmatpush.bf16.msra.mxu0 %v544
    %716 = vmatmul.bf16.gmra.mxu0 %v210
    %v717 = vpop.f32.mrf.mxu0
    %v718 = vadd.f32 %v705, %v717
    %v719 = vpop.f32.mrf.mxu0
    %720 = vdwg.mxu0
    %721 = vmatpush.bf16.msra.mxu0 %v559
    %722 = vmatpush.bf16.msra.mxu0 %v558
    %723 = vmatpush.bf16.msra.mxu0 %v557
    %724 = vmatpush.bf16.msra.mxu0 %v556
    %725 = vmatpush.bf16.msra.mxu0 %v555
    %726 = vmatpush.bf16.msra.mxu0 %v554
    %727 = vmatpush.bf16.msra.mxu0 %v553
    %728 = vmatpush.bf16.msra.mxu0 %v552
    %729 = vmatmul.bf16.gmra.mxu0 %v211
    %v730 = vpop.f32.mrf.mxu0
    %v731 = vadd.f32 %v718, %v730
    %v732 = vpop.f32.mrf.mxu0
    %733 = vdwg.mxu0
    %734 = vmatpush.bf16.msra.mxu0 %v567
    %735 = vmatpush.bf16.msra.mxu0 %v566
    %736 = vmatpush.bf16.msra.mxu0 %v565
    %737 = vmatpush.bf16.msra.mxu0 %v564
    %738 = vmatpush.bf16.msra.mxu0 %v563
    %739 = vmatpush.bf16.msra.mxu0 %v562
    %740 = vmatpush.bf16.msra.mxu0 %v561
    %741 = vmatpush.bf16.msra.mxu0 %v560
    %742 = vmatmul.bf16.gmra.mxu0 %v212
    %v743 = vpop.f32.mrf.mxu0
    %v744 = vadd.f32 %v731, %v743
    %v745 = vpop.f32.mrf.mxu0
    %746 = vdwg.mxu0
    %747 = vmatpush.bf16.msra.mxu0 %v575
    %748 = vmatpush.bf16.msra.mxu0 %v574
    %749 = vmatpush.bf16.msra.mxu0 %v573
    %750 = vmatpush.bf16.msra.mxu0 %v572
    %751 = vmatpush.bf16.msra.mxu0 %v571
    %752 = vmatpush.bf16.msra.mxu0 %v570
    %753 = vmatpush.bf16.msra.mxu0 %v569
    %754 = vmatpush.bf16.msra.mxu0 %v568
    %755 = vmatmul.bf16.gmra.mxu0 %v213
    %v756 = vpop.f32.mrf.mxu0
    %v757 = vadd.f32 %v744, %v756
    %v758 = vpop.f32.mrf.mxu0
    %759 = vdwg.mxu0
    %760 = vmatpush.bf16.msra.mxu0 %v583
    %761 = vmatpush.bf16.msra.mxu0 %v582
    %762 = vmatpush.bf16.msra.mxu0 %v581
    %763 = vmatpush.bf16.msra.mxu0 %v580
    %764 = vmatpush.bf16.msra.mxu0 %v579
    %765 = vmatpush.bf16.msra.mxu0 %v578
    %766 = vmatpush.bf16.msra.mxu0 %v577
    %767 = vmatpush.bf16.msra.mxu0 %v576
    %768 = vmatmul.bf16.gmra.mxu0 %v214
    %v769 = vpop.f32.mrf.mxu0
    %v770 = vadd.f32 %v757, %v769
    %v771 = vpop.f32.mrf.mxu0
    %772 = vdwg.mxu0
    %v773 = vmax.f32 %v770, 0.0
    %v774 = vpack.c.bf16 %v773, %v773
    %v791 = vunpack.c.l.b16 %v176
    %v792 = vunpack.c.l.b16 %v177
    %v793 = vunpack.c.l.b16 %v178
    %v794 = vunpack.c.l.b16 %v179
    %v795 = vunpack.c.l.b16 %v180
    %v796 = vunpack.c.l.b16 %v181
    %v797 = vunpack.c.l.b16 %v182
    %v798 = vunpack.c.l.b16 %v183
    %v799 = vunpack.c.l.b16 %v184
    %v800 = vunpack.c.l.b16 %v185
    %v801 = vunpack.c.l.b16 %v186
    %v802 = vunpack.c.l.b16 %v187
    %v803 = vunpack.c.l.b16 %v188
    %v804 = vunpack.c.l.b16 %v189
    %v805 = vunpack.c.l.b16 %v190
    %v806 = vunpack.c.l.b16 %v191
    %v807 = vpack.c.b16 %v792, %v791
    %v808 = vpack.c.b16 %v794, %v793
    %v809 = vpack.c.b16 %v796, %v795
    %v810 = vpack.c.b16 %v798, %v797
    %v811 = vpack.c.b16 %v800, %v799
    %v812 = vpack.c.b16 %v802, %v801
    %v813 = vpack.c.b16 %v804, %v803
    %v814 = vpack.c.b16 %v806, %v805
    %823 = vmatpush.bf16.msra.mxu0 %v814
    %824 = vmatpush.bf16.msra.mxu0 %v813
    %825 = vmatpush.bf16.msra.mxu0 %v812
    %826 = vmatpush.bf16.msra.mxu0 %v811
    %827 = vmatpush.bf16.msra.mxu0 %v810
    %828 = vmatpush.bf16.msra.mxu0 %v809
    %829 = vmatpush.bf16.msra.mxu0 %v808
    %830 = vmatpush.bf16.msra.mxu0 %v807
    %831 = vmatmul.bf16.gmra.mxu0 %v774
    %v832 = vpop.f32.mrf.mxu0
    %v833 = vadd.f32 0.0, %v832
    %v834 = vpop.f32.mrf.mxu0
    %835 = vdwg.mxu0
    %836 = vst [vmem:[%s2] sm:$0xff] %v833
    // Predicated region
    $region14: #{textcnn_forward.1} parent=1 // pred_check
      _
    $region15: #{textcnn_forward.1} parent=1 // pred_check_branch
      %838 = sbr.rel (0) target = $region17
    $region16: #{textcnn_forward.1} parent=1 // pred_region
      _
    $region17: #{textcnn_forward.1} parent=1 // pred_fallthru
      _
    // Predicated region
    $region18: #{textcnn_forward.1} parent=1 // pred_check
      _
    $region19: #{textcnn_forward.1} parent=1 // pred_check_branch
      %840 = sbr.rel (0) target = $region21
    $region20: #{textcnn_forward.1} parent=1 // pred_region
      _
    $region21: #{textcnn_forward.1} parent=1 // pred_fallthru
      _
    %841 = vsyncpa [#allocation3], 1

</llo_original>
